<compile_context>
chip_gen: v6e
topology: v6e:2x2x1
jax: 0.10.0
libtpu: 0.0.40
codegen_flags: <defaults>
</compile_context>

<pallas_src>
import jax
import jax.numpy as jnp
from jax import lax
from jax.experimental import pallas as pl
from jax.experimental.pallas import tpu as pltpu


def _round_up(x: int, m: int) -> int:
    return ((x + m - 1) // m) * m


def _cdiv(a: int, b: int) -> int:
    return (a + b - 1) // b


def _patch_embed_kernel(x_ref, w_ref, b_ref, o_ref):
    # x_ref: (TM, K) bf16  -- tile of flattened patches (M = B * n_patches)
    # w_ref: (K,  E) bf16  -- conv weight reshaped/transposed (resident)
    # b_ref: (1,  E) f32   -- conv bias (resident)
    # o_ref: (TM, E) out_dtype (bf16 by default)
    acc = jnp.dot(x_ref[...], w_ref[...],
                  preferred_element_type=jnp.float32)        # MXU, f32 accumulate
    o_ref[...] = (acc + b_ref[...]).astype(o_ref.dtype)      # f32 bias add, cast on store


def _vmem_caps():
    """(budget, capacity): budget ~70% of this generation's per-core VMEM."""
    cap = 64 * 1024 * 1024                      # conservative fallback (~v7x per-TC)
    try:
        info_cap = int(getattr(pltpu.get_tpu_info(), "vmem_capacity_bytes", 0))
        if info_cap > 0:
            cap = info_cap
    except Exception:
        pass
    return int(0.70 * cap), cap


def patch_embed(x, weight, bias, patch_size, *, tile_m=512,
                out_dtype=jnp.bfloat16):
    """x: (B, C, H, W); weight: (E, C, P, P); bias: (E,).

    Returns (B, n_patches, E) in `out_dtype` (bf16 by default; f32 accumulate
    inside) — same math as the PyTorch Conv2d(stride=P) + flatten + transpose.
    """
    B, C, H, W = x.shape
    E = weight.shape[0]
    P = patch_size
    hp, wp = H // P, W // P                     # assumes H, W divisible by P (as PyTorch)
    n_patches = hp * wp
    K = C * P * P
    M = B * n_patches

    # im2col: each patch flattened in (c, kh, kw) order to match Conv2d's OIHW
    # weight layout, cast to bf16.  Offered to XLA for input fusion (see
    # allow_input_fusion below) so it ideally never lands in HBM as a separate
    # tensor.  No K/M/E padding anywhere.
    xp = x.reshape(B, C, hp, P, wp, P)
    xp = jnp.transpose(xp, (0, 2, 4, 1, 3, 5)).reshape(M, K).astype(jnp.bfloat16)

    # Weight / bias prep (tiny; in production hoist to init).
    w2d = jnp.transpose(weight.reshape(E, K)).astype(jnp.bfloat16)   # (K, E)
    b2d = bias.astype(jnp.float32).reshape(1, E)

    out_itemsize = jnp.dtype(out_dtype).itemsize

    def _vmem_needed(tm_):
        return (2 * tm_ * K * 2                 # x tile, bf16, double-buffered
                + 2 * tm_ * E * out_itemsize    # out tile, double-buffered
                + 2 * K * E * 2                 # resident weight (2 bufs, worst case)
                + 2 * E * 4                     # resident bias
                + tm_ * E * 4)                  # f32 accumulate intermediate

    vmem_budget, vmem_cap = _vmem_caps()

    # tm: aim for >= ~8 grid steps, keep it a multiple of 128, fit VMEM budget.
    tm = min(tile_m, max(128, _round_up(_cdiv(M, 8), 128)))
    while _vmem_needed(tm) > vmem_budget and tm > 128:
        tm = max(128, _round_up(tm // 2, 128))
    tm = min(tm, M)                             # tiny-M case: single full-extent block

    grid_m = _cdiv(M, tm)                       # ragged tail handled by edge clipping

    vmem_limit = int(min(0.85 * vmem_cap,
                         max(2 * _vmem_needed(tm), 32 * 1024 * 1024)))

    cost = pl.CostEstimate(
        flops=2 * M * K * E,
        transcendentals=0,
        bytes_accessed=M * K * 2 + K * E * 2 + E * 4 + M * E * out_itemsize)

    out = pl.pallas_call(
        _patch_embed_kernel,
        out_shape=jax.ShapeDtypeStruct((M, E), out_dtype),
        grid_spec=pltpu.PrefetchScalarGridSpec(
            num_scalar_prefetch=0,
            grid=(grid_m,),
            in_specs=[
                pl.BlockSpec((tm, K), lambda i: (i, 0)),   # patch tile (full-K)
                pl.BlockSpec((K, E), lambda i: (0, 0)),    # resident weight
                pl.BlockSpec((1, E), lambda i: (0, 0)),    # resident bias
            ],
            out_specs=pl.BlockSpec((tm, E), lambda i: (i, 0)),
        ),
        compiler_params=pltpu.CompilerParams(
            dimension_semantics=("parallel",),             # shard M across TCs (v7x)
            vmem_limit_bytes=vmem_limit,
            allow_input_fusion=[True, False, False]),      # fuse im2col into input fetch
        cost_estimate=cost,
    )(xp, w2d, b2d)

    return out.reshape(B, n_patches, E)


def _reference(x, weight, bias, patch_size):
    # Pure-JAX reference: strided conv (NCHW, OIHW), then flatten + transpose,
    # mirroring the PyTorch forward in f32.
    y = lax.conv_general_dilated(
        x, weight,
        window_strides=(patch_size, patch_size),
        padding="VALID",
        dimension_numbers=("NCHW", "OIHW", "NCHW"))
    y = y + bias[None, :, None, None]
    B, E, hp, wp = y.shape
    return jnp.transpose(y.reshape(B, E, hp * wp), (0, 2, 1))


if __name__ == "__main__":
    # Small shapes consistent with the module:
    # batch=2, in_chans=4, img_size=16, patch_size=4, embed_dim=32
    B, C, IMG, P, E = 2, 4, 16, 4, 32

    key = jax.random.PRNGKey(0)
    kx, kw, kb = jax.random.split(key, 3)
    x = jax.random.normal(kx, (B, C, IMG, IMG), dtype=jnp.float32)
    weight = jax.random.normal(kw, (E, C, P, P), dtype=jnp.float32) * 0.02
    bias = jax.random.normal(kb, (E,), dtype=jnp.float32) * 0.02

    out = patch_embed(x, weight, bias, P)          # bf16 output (default)
    out = jax.block_until_ready(out)

    ref = _reference(x, weight, bias, P)
    assert out.shape == (B, (IMG // P) ** 2, E), out.shape
    assert out.dtype == jnp.bfloat16, out.dtype
    # bf16 matmul inputs / bf16 output with f32 accumulation -> bf16 tolerances.
    assert jnp.allclose(out.astype(jnp.float32), ref, atol=2e-2, rtol=2e-2), \
        "mismatch vs conv reference"
    print("KERNEL_OK")
</pallas_src>

<mosaic_0001>
module attributes {stable_mosaic.version = 11 : i64} {
  func.func @_patch_embed_kernel(%arg0: i32, %arg1: memref<32x64xbf16, #tpu.memory_space<vmem>>, %arg2: memref<64x32xbf16, #tpu.memory_space<vmem>>, %arg3: memref<1x32xf32, #tpu.memory_space<vmem>>, %arg4: memref<32x32xbf16, #tpu.memory_space<vmem>>) attributes {dimension_semantics = [#tpu.dimension_semantics<parallel>], iteration_bounds = array<i64: 1>, scalar_prefetch = 0 : i64, scratch_operands = 0 : i64, tpu.core_type = #tpu.core_type<tc>, window_params = [{transform_indices = @transform_0, window_bounds = array<i64: 32, 64>}, {pipeline_mode = #tpu.pipeline_mode<synchronous>, transform_indices = @transform_1, window_bounds = array<i64: 64, 32>}, {pipeline_mode = #tpu.pipeline_mode<synchronous>, transform_indices = @transform_2, window_bounds = array<i64: 1, 32>}, {transform_indices = @transform_3, window_bounds = array<i64: 32, 32>}]} {
    %c0 = arith.constant 0 : index
    %c0_0 = arith.constant 0 : index
    %0 = vector.load %arg1[%c0, %c0_0] : memref<32x64xbf16, #tpu.memory_space<vmem>>, vector<32x64xbf16>
    %c0_1 = arith.constant 0 : index
    %c0_2 = arith.constant 0 : index
    %1 = vector.load %arg2[%c0_1, %c0_2] : memref<64x32xbf16, #tpu.memory_space<vmem>>, vector<64x32xbf16>
    %cst = arith.constant dense<0.000000e+00> : vector<32x32xf32>
    %2 = tpu.matmul %0, %1, %cst {dimension_numbers = #tpu.dot_dimension_numbers<[1], [0], [0], [1], [0, 0, 1, 1], [], []>} : vector<32x64xbf16>, vector<64x32xbf16>, vector<32x32xf32> -> vector<32x32xf32>
    %c0_3 = arith.constant 0 : index
    %c0_4 = arith.constant 0 : index
    %3 = vector.load %arg3[%c0_3, %c0_4] : memref<1x32xf32, #tpu.memory_space<vmem>>, vector<1x32xf32>
    %4 = vector.broadcast %3 : vector<1x32xf32> to vector<32x32xf32>
    %5 = arith.addf %2, %4 : vector<32x32xf32>
    %6 = arith.truncf %5 : vector<32x32xf32> to vector<32x32xbf16>
    %c0_5 = arith.constant 0 : index
    %c0_6 = arith.constant 0 : index
    %7 = vector.load %arg4[%c0_5, %c0_6] : memref<32x32xbf16, #tpu.memory_space<vmem>>, vector<32x32xbf16>
    tpu.vector_store %arg4[%c0_5, %c0_6], %6 {strides = array<i32>} : memref<32x32xbf16, #tpu.memory_space<vmem>>, vector<32x32xbf16>,
    return
  }
  func.func @transform_0(%arg0: i32) -> (i32, i32) {
    %c0_i32 = arith.constant 0 : i32
    %c0_i32_0 = arith.constant 0 : i32
    return %arg0, %c0_i32 : i32, i32
  }
  func.func @transform_1(%arg0: i32) -> (i32, i32) {
    %c0_i32 = arith.constant 0 : i32
    %c0_i32_0 = arith.constant 0 : i32
    %c0_i32_1 = arith.constant 0 : i32
    return %c0_i32, %c0_i32_0 : i32, i32
  }
  func.func @transform_2(%arg0: i32) -> (i32, i32) {
    %c0_i32 = arith.constant 0 : i32
    %c0_i32_0 = arith.constant 0 : i32
    %c0_i32_1 = arith.constant 0 : i32
    return %c0_i32, %c0_i32_0 : i32, i32
  }
  func.func @transform_3(%arg0: i32) -> (i32, i32) {
    %c0_i32 = arith.constant 0 : i32
    %c0_i32_0 = arith.constant 0 : i32
    return %arg0, %c0_i32 : i32, i32
  }
}

</mosaic_0001>

<llo_original>
// kernel: tpu_custom_call.1
$region0: #{tpu_custom_call.1}
  #allocation0 [shape = 'u32[]', space=smem, size = 0x4, offset = 0x4, fixed_abs, tag = 'smem constant byte address 0x4 - core index']
  #allocation1 [shape = 'u32[144,128]{1,0:T(1,128)}', space=vmem, size = 0x12000, scoped, tag = 'internal scratch']
  %s0 = inlined_call_operand.vmem [shape: bf16[32,64], index: 0, kind: input, shape index: {}]
  %s1 = inlined_call_operand.vmem [shape: bf16[64,32], index: 1, kind: input, shape index: {}]
  %s2 = inlined_call_operand.vmem [shape: f32[1,32], index: 2, kind: input, shape index: {}]
  %s3 = inlined_call_operand.hbm [shape: bf16[32,32], index: 3, kind: output, shape index: {}]
  %s4 = sld [smem:[#allocation0]]
  $region22: #{tpu_custom_call.1} parent=0
    _
  %s6 = ssub.s32 1, %s4
  %s7 = scalar_select 0, %s6, %s4
  $region1: #{tpu_custom_call.1} parent=0
    #allocation2 [shape = 'u8[8192]{0}', space=vmem, size = 0x2000, scoped, tag = 'output window, operand 0, single buffered']
    #allocation3 [shape = 's32[1]{0}', space=sflag, size = 0x4, scoped, tag = 'scoped memory for tpu_custom_call.1']
    %8 = vsyncpa [#allocation3], 0
    // Predicated region
    $region2: #{tpu_custom_call.1} parent=1 // pred_check
      _
    $region3: #{tpu_custom_call.1} parent=1 // pred_check_branch
      %10 = sbr.rel (0) target = $region5
    $region4: #{tpu_custom_call.1} parent=1 // pred_region
      _
    $region5: #{tpu_custom_call.1} parent=1 // pred_fallthru
      _
    // Predicated region
    $region6: #{tpu_custom_call.1} parent=1 // pred_check
      _
    $region7: #{tpu_custom_call.1} parent=1 // pred_check_branch
      %12 = sbr.rel (0) target = $region9
    $region8: #{tpu_custom_call.1} parent=1 // pred_region
      _
    $region9: #{tpu_custom_call.1} parent=1 // pred_fallthru
      _
    // Predicated region
    $region10: #{tpu_custom_call.1} parent=1 // pred_check
      _
    $region11: #{tpu_custom_call.1} parent=1 // pred_check_branch
      %14 = sbr.rel (0) target = $region13
    $region12: #{tpu_custom_call.1} parent=1 // pred_region
      _
    $region13: #{tpu_custom_call.1} parent=1 // pred_fallthru
      _
    %v16 = vld [vmem:[%s0] sm:$0xf]
    %v17 = vld [vmem:[%s0 + $0x4] sm:$0xf]
    %v18 = vld [vmem:[%s0 + $0x8] sm:$0xf]
    %v19 = vld [vmem:[%s0 + $0xc] sm:$0xf]
    %v20 = vld [vmem:[%s1] sm:$0xf]
    %v21 = vld [vmem:[%s1 + $0x4] sm:$0xf]
    %v22 = vld [vmem:[%s1 + $0x8] sm:$0xf]
    %v23 = vld [vmem:[%s1 + $0xc] sm:$0xf]
    %v24 = vld [vmem:[%s1 + $0x10] sm:$0xf]
    %v25 = vld [vmem:[%s1 + $0x14] sm:$0xf]
    %v26 = vld [vmem:[%s1 + $0x18] sm:$0xf]
    %v27 = vld [vmem:[%s1 + $0x1c] sm:$0xf]
    %v28 = vld [vmem:[%s2] sm:$0x1]
    %v30 = vlaneseq
    %v31 = vshrl.u32 %v30, 7
    %v32 = vsub.s32 0, %v31
    %v33 = vrot.slane %v28, %v32
    %v39 = vunpack.c.l.b16 %v16
    %v40 = vunpack.c.l.b16 %v17
    %v41 = vunpack.c.l.b16 %v18
    %v42 = vunpack.c.l.b16 %v19
    %v43 = vpack.c.b16 %v40, %v39
    %v44 = vpack.c.b16 %v42, %v41
    %v53 = vunpack.c.l.b16 %v20
    %v54 = vunpack.c.l.b16 %v21
    %v55 = vunpack.c.l.b16 %v22
    %v56 = vunpack.c.l.b16 %v23
    %v57 = vunpack.c.l.b16 %v24
    %v58 = vunpack.c.l.b16 %v25
    %v59 = vunpack.c.l.b16 %v26
    %v60 = vunpack.c.l.b16 %v27
    %v61 = vpack.c.b16 %v54, %v53
    %v62 = vpack.c.b16 %v56, %v55
    %v63 = vpack.c.b16 %v58, %v57
    %v64 = vpack.c.b16 %v60, %v59
    %vm69 = vcmask 523264
    %v71 = vsel %vm69, %v43, 0
    %v74 = vsel %vm69, %v44, 0
    %76 = vmatprep.subr.bf16.mxu0 0
    %77 = vmatpush1.bf16.msra.mxu0 0
    %78 = vmatprep.subr.bf16.mxu0 0
    %79 = vmatpush1.bf16.msra.mxu0 0
    %80 = vmatprep.subr.bf16.mxu0 0
    %81 = vmatpush1.bf16.msra.mxu0 0
    %82 = vmatprep.subr.bf16.mxu0 0
    %83 = vmatpush1.bf16.msra.mxu0 0
    %84 = vmatprep.subr.bf16.mxu0 0
    %85 = vmatpush1.bf16.msra.mxu0 %v64
    %86 = vmatprep.subr.bf16.mxu0 0
    %87 = vmatpush1.bf16.msra.mxu0 %v63
    %88 = vmatprep.subr.bf16.mxu0 0
    %89 = vmatpush1.bf16.msra.mxu0 %v62
    %90 = vmatprep.subr.bf16.mxu0 0
    %91 = vmatpush1.bf16.msra.mxu0 %v61
    %92 = vmatprep.subr.bf16.mxu0 0
    %93 = vmatpush2.bf16.msra.mxu0 0
    %94 = vmatprep.subr.bf16.mxu0 0
    %95 = vmatpush2.bf16.msra.mxu0 0
    %96 = vmatprep.subr.bf16.mxu0 0
    %97 = vmatpush2.bf16.msra.mxu0 0
    %98 = vmatprep.subr.bf16.mxu0 0
    %99 = vmatpush2.bf16.msra.mxu0 0
    %100 = vmatprep.subr.bf16.mxu0 0
    %101 = vmatpush2.bf16.msra.mxu0 0
    %102 = vmatprep.subr.bf16.mxu0 0
    %103 = vmatpush2.bf16.msra.mxu0 0
    %104 = vmatprep.subr.bf16.mxu0 0
    %105 = vmatpush2.bf16.msra.mxu0 0
    %106 = vmatprep.subr.bf16.mxu0 0
    %107 = vmatpush2.bf16.msra.mxu0 0
    %108 = vmatprep.mubr.bf16.mxu0 0
    %109 = vmatmul.mubr.bf16.gmra.mxu0 %v71
    %v110 = vpop.f32.mrf.mxu0
    %v111 = vadd.f32 %v33, %v110
    %v112 = vpop.f32.mrf.mxu0
    %v113 = vpop.f32.mrf.mxu0
    %v114 = vadd.f32 %v33, %v113
    %v115 = vpop.f32.mrf.mxu0
    %116 = vmatprep.mubr.bf16.mxu0 0
    %117 = vmatmul.mubr.bf16.gmra.mxu0 %v74
    %v118 = vpop.f32.mrf.mxu0
    %v119 = vadd.f32 %v33, %v118
    %v120 = vpop.f32.mrf.mxu0
    %v121 = vpop.f32.mrf.mxu0
    %v122 = vadd.f32 %v33, %v121
    %v123 = vpop.f32.mrf.mxu0
    %124 = vdwg.mxu0
    %v125 = vpack.c.bf16 %v114, %v111
    %v126 = vpack.c.bf16 %v122, %v119
    %v129 = vunpack.c.l.b16 %v125
    %v130 = vunpack.c.h.b16 %v125
    %v131 = vunpack.c.l.b16 %v126
    %v132 = vunpack.c.h.b16 %v126
    %v133 = vpack.c.b16 %v129, %v129
    %v134 = vpack.c.b16 %v130, %v130
    %v135 = vpack.c.b16 %v131, %v131
    %v136 = vpack.c.b16 %v132, %v132
    %vm141 = vcmask 257024
    %142 = vst.msk [vmem:[#allocation2] sm:$0xf] %vm141, %v133
    %143 = vst.msk [vmem:[#allocation2 + $0x4] sm:$0xf] %vm141, %v134
    %144 = vst.msk [vmem:[#allocation2 + $0x8] sm:$0xf] %vm141, %v135
    %145 = vst.msk [vmem:[#allocation2 + $0xc] sm:$0xf] %vm141, %v136
    // Predicated region
    $region14: #{tpu_custom_call.1} parent=1 // pred_check
      _
    $region15: #{tpu_custom_call.1} parent=1 // pred_check_branch
      %147 = sbr.rel (0) target = $region17
    $region16: #{tpu_custom_call.1} parent=1 // pred_region
      %s149 = ssub.s32 256, 256
      %150 = vsyncadd [#allocation3], %s149
      %s151 = sshll.u32 [#allocation2], 4
      %s152 = int_to_ptr.vmem [resolvable:$true] %s151
      %157 = dma.vmem_to_hbm [thread:$0]  %s152, 256, %s3, [#allocation3], 64, 64, 4
    $region17: #{tpu_custom_call.1} parent=1 // pred_fallthru
      _
    // Predicated region
    $region18: #{tpu_custom_call.1} parent=1 // pred_check
      _
    $region19: #{tpu_custom_call.1} parent=1 // pred_check_branch
      %159 = sbr.rel (0) target = $region21
    $region20: #{tpu_custom_call.1} parent=1 // pred_region
      %160 = dma.done [#allocation3], 256
    $region21: #{tpu_custom_call.1} parent=1 // pred_fallthru
      _
    %161 = vsyncpa [#allocation3], 1

</llo_original>
